<compile_context>
chip_gen: v6e
topology: v6e:2x2x1
jax: 0.10.0
libtpu: 0.0.40
codegen_flags: <defaults>
</compile_context>

<pallas_src>
import functools
import math

import jax
import jax.numpy as jnp
from jax.experimental import pallas as pl
from jax.experimental.pallas import tpu as pltpu


def _round_up(x, m):
    return (x + m - 1) // m * m


def _sae_kernel(batch, tile_b, mask_rows,
                h_ref, w_enc_ref, b_enc_ref, w_dec_ref, b_dec_ref,
                acts_ref, hrec_ref, lrec_ref, lsp_ref):
    # Encoder: z = h @ W_enc + b_enc ; acts = relu(z)   (MXU + VPU)
    h = h_ref[...]
    z = jnp.dot(h, w_enc_ref[...], preferred_element_type=jnp.float32)
    z = z + b_enc_ref[...].astype(jnp.float32)
    acts = jnp.maximum(z, 0.0)

    # Decoder: h_rec = acts @ W_dec + b_dec   (MXU)
    h_rec = jnp.dot(acts.astype(w_dec_ref.dtype), w_dec_ref[...],
                    preferred_element_type=jnp.float32)
    h_rec = h_rec + b_dec_ref[...].astype(jnp.float32)

    acts_ref[...] = acts.astype(acts_ref.dtype)
    hrec_ref[...] = h_rec.astype(hrec_ref.dtype)

    # Per-tile partial loss sums: row-wise reduce first (XLU work interleaves
    # with VPU), accumulate, mean is finished in the wrapper.
    diff = h_rec - h.astype(jnp.float32)
    rec_rows = jnp.sum(diff * diff, axis=-1, keepdims=True)    # (tile_b, 1)
    sp_rows = jnp.sum(jnp.abs(acts), axis=-1, keepdims=True)   # (tile_b, 1)

    if mask_rows:
        # Zero-padded batch rows still produce non-zero acts / h_rec through
        # the biases, so mask their loss contribution.
        row = pl.program_id(0) * tile_b + jax.lax.broadcasted_iota(
            jnp.int32, (tile_b, 1), 0)
        valid = (row < batch).astype(jnp.float32)
        rec_rows = rec_rows * valid
        sp_rows = sp_rows * valid

    lrec_ref[...] = jnp.broadcast_to(jnp.sum(rec_rows), (1, 1, 128)).astype(jnp.float32)
    lsp_ref[...] = jnp.broadcast_to(jnp.sum(sp_rows), (1, 1, 128)).astype(jnp.float32)


def sae_forward(h, w_enc, b_enc, w_dec, b_dec, l1_coeff=0.1):
    """Returns (sparsity_loss, L_reconstruction, L_sparsity, acts, h_reconstructed)."""
    batch, d_in = h.shape
    d_hidden = w_enc.shape[1]

    # Pad feature axes to 128 lanes, batch to the batch-tile (multiple of 16).
    d_in_p = _round_up(d_in, 128)
    d_hid_p = _round_up(d_hidden, 128)
    tile_b = min(256, _round_up(batch, 16))
    batch_p = _round_up(batch, tile_b)
    n_tiles = batch_p // tile_b

    h_p = jnp.pad(h, ((0, batch_p - batch), (0, d_in_p - d_in)))
    w_enc_p = jnp.pad(w_enc, ((0, d_in_p - d_in), (0, d_hid_p - d_hidden)))
    b_enc_p = jnp.pad(b_enc, (0, d_hid_p - d_hidden)).reshape(1, d_hid_p)
    w_dec_p = jnp.pad(w_dec, ((0, d_hid_p - d_hidden), (0, d_in_p - d_in)))
    b_dec_p = jnp.pad(b_dec, (0, d_in_p - d_in)).reshape(1, d_in_p)

    kernel = functools.partial(_sae_kernel, batch, tile_b, batch_p != batch)

    dtype_bytes = h.dtype.itemsize
    cost = pl.CostEstimate(
        flops=4 * batch * d_in * d_hidden,               # two matmuls
        transcendentals=0,
        bytes_accessed=(h.size + w_enc.size + w_dec.size
                        + batch * d_hidden + batch * d_in) * dtype_bytes,
    )

    acts_p, hrec_p, lrec_parts, lsp_parts = pl.pallas_call(
        kernel,
        grid=(n_tiles,),
        in_specs=[
            pl.BlockSpec((tile_b, d_in_p), lambda i: (i, 0)),      # h tile
            pl.BlockSpec((d_in_p, d_hid_p), lambda i: (0, 0)),     # W_enc (resident)
            pl.BlockSpec((1, d_hid_p), lambda i: (0, 0)),          # b_enc
            pl.BlockSpec((d_hid_p, d_in_p), lambda i: (0, 0)),     # W_dec (resident)
            pl.BlockSpec((1, d_in_p), lambda i: (0, 0)),           # b_dec
        ],
        out_specs=(
            pl.BlockSpec((tile_b, d_hid_p), lambda i: (i, 0)),     # acts
            pl.BlockSpec((tile_b, d_in_p), lambda i: (i, 0)),      # h_rec
            pl.BlockSpec((1, 1, 128), lambda i: (i, 0, 0)),        # L_rec partials
            pl.BlockSpec((1, 1, 128), lambda i: (i, 0, 0)),        # L_sp partials
        ),
        out_shape=(
            jax.ShapeDtypeStruct((batch_p, d_hid_p), h.dtype),
            jax.ShapeDtypeStruct((batch_p, d_in_p), h.dtype),
            jax.ShapeDtypeStruct((n_tiles, 1, 128), jnp.float32),
            jax.ShapeDtypeStruct((n_tiles, 1, 128), jnp.float32),
        ),
        compiler_params=pltpu.CompilerParams(
            dimension_semantics=("parallel",)),
        cost_estimate=cost,
    )(h_p, w_enc_p, b_enc_p, w_dec_p, b_dec_p)

    acts = acts_p[:batch, :d_hidden]
    h_rec = hrec_p[:batch, :d_in]
    l_rec = jnp.sum(lrec_parts[:, 0, 0]) / (batch * d_in)      # mse mean
    l_sp = jnp.sum(lsp_parts[:, 0, 0]) / (batch * d_hidden)    # acts.abs().mean()
    sparsity_loss = l1_coeff * l_sp
    return sparsity_loss, l_rec, l_sp, acts, h_rec


def _kaiming_uniform(key, shape):
    # PyTorch kaiming_uniform_(nonlinearity='relu'): bound = sqrt(2)*sqrt(3/fan_in).
    fan_in = shape[1]
    bound = math.sqrt(2.0) * math.sqrt(3.0 / fan_in)
    return jax.random.uniform(key, shape, jnp.float32, -bound, bound)


if __name__ == "__main__":
    # Small shapes consistent with the module: batch=8, d_in=32, d_hidden=128.
    batch, d_in, d_hidden = 8, 32, 128
    l1_coeff = 0.1

    key = jax.random.PRNGKey(0)
    k_h, k_we, k_wd = jax.random.split(key, 3)

    h = jax.random.normal(k_h, (batch, d_in), jnp.float32)
    w_enc = _kaiming_uniform(k_we, (d_in, d_hidden))
    b_enc = jnp.zeros((d_hidden,), jnp.float32)
    w_dec = _kaiming_uniform(k_wd, (d_hidden, d_in))   # tied_weights=False path
    b_dec = jnp.zeros((d_in,), jnp.float32)

    out = sae_forward(h, w_enc, b_enc, w_dec, b_dec, l1_coeff)
    out = jax.block_until_ready(out)

    # Correctness check against a pure-JAX reference.
    z_ref = h @ w_enc + b_enc
    acts_ref = jnp.maximum(z_ref, 0.0)
    hrec_ref = acts_ref @ w_dec + b_dec
    lrec_ref = jnp.mean((hrec_ref - h) ** 2)
    lsp_ref = jnp.mean(jnp.abs(acts_ref))

    assert jnp.allclose(out[3], acts_ref, atol=1e-5)
    assert jnp.allclose(out[4], hrec_ref, atol=1e-5)
    assert jnp.allclose(out[1], lrec_ref, atol=1e-5)
    assert jnp.allclose(out[2], lsp_ref, atol=1e-5)
    assert jnp.allclose(out[0], l1_coeff * lsp_ref, atol=1e-5)

    print("KERNEL_OK")
</pallas_src>

<mosaic_0001>
module attributes {stable_mosaic.version = 11 : i64} {
  func.func @_sae_kernel(%arg0: i32, %arg1: memref<16x128xf32, #tpu.memory_space<vmem>>, %arg2: memref<128x128xf32, #tpu.memory_space<vmem>>, %arg3: memref<1x128xf32, #tpu.memory_space<vmem>>, %arg4: memref<128x128xf32, #tpu.memory_space<vmem>>, %arg5: memref<1x128xf32, #tpu.memory_space<vmem>>, %arg6: memref<16x128xf32, #tpu.memory_space<vmem>>, %arg7: memref<16x128xf32, #tpu.memory_space<vmem>>, %arg8: memref<1x1x128xf32, #tpu.memory_space<vmem>>, %arg9: memref<1x1x128xf32, #tpu.memory_space<vmem>>) attributes {dimension_semantics = [#tpu.dimension_semantics<parallel>], iteration_bounds = array<i64: 1>, scalar_prefetch = 0 : i64, scratch_operands = 0 : i64, tpu.core_type = #tpu.core_type<tc>, window_params = [{transform_indices = @transform_0, window_bounds = array<i64: 16, 128>}, {pipeline_mode = #tpu.pipeline_mode<synchronous>, transform_indices = @transform_1, window_bounds = array<i64: 128, 128>}, {pipeline_mode = #tpu.pipeline_mode<synchronous>, transform_indices = @transform_2, window_bounds = array<i64: 1, 128>}, {pipeline_mode = #tpu.pipeline_mode<synchronous>, transform_indices = @transform_3, window_bounds = array<i64: 128, 128>}, {pipeline_mode = #tpu.pipeline_mode<synchronous>, transform_indices = @transform_4, window_bounds = array<i64: 1, 128>}, {transform_indices = @transform_5, window_bounds = array<i64: 16, 128>}, {transform_indices = @transform_6, window_bounds = array<i64: 16, 128>}, {transform_indices = @transform_7, window_bounds = array<i64: 1, 1, 128>}, {transform_indices = @transform_8, window_bounds = array<i64: 1, 1, 128>}]} {
    %c0 = arith.constant 0 : index
    %c0_0 = arith.constant 0 : index
    %0 = vector.load %arg1[%c0, %c0_0] : memref<16x128xf32, #tpu.memory_space<vmem>>, vector<16x128xf32>
    %c0_1 = arith.constant 0 : index
    %c0_2 = arith.constant 0 : index
    %1 = vector.load %arg2[%c0_1, %c0_2] : memref<128x128xf32, #tpu.memory_space<vmem>>, vector<128x128xf32>
    %cst = arith.constant dense<0.000000e+00> : vector<16x128xf32>
    %2 = tpu.matmul %0, %1, %cst {dimension_numbers = #tpu.dot_dimension_numbers<[1], [0], [0], [1], [0, 0, 1, 1], [], []>} : vector<16x128xf32>, vector<128x128xf32>, vector<16x128xf32> -> vector<16x128xf32>
    %c0_3 = arith.constant 0 : index
    %c0_4 = arith.constant 0 : index
    %3 = vector.load %arg3[%c0_3, %c0_4] : memref<1x128xf32, #tpu.memory_space<vmem>>, vector<1x128xf32>
    %4 = vector.broadcast %3 : vector<1x128xf32> to vector<16x128xf32>
    %5 = arith.addf %2, %4 : vector<16x128xf32>
    %cst_5 = arith.constant 0.000000e+00 : f32
    %6 = vector.broadcast %cst_5 : f32 to vector<16x128xf32>
    %7 = arith.maximumf %5, %6 : vector<16x128xf32>
    %c0_6 = arith.constant 0 : index
    %c0_7 = arith.constant 0 : index
    %8 = vector.load %arg4[%c0_6, %c0_7] : memref<128x128xf32, #tpu.memory_space<vmem>>, vector<128x128xf32>
    %cst_8 = arith.constant dense<0.000000e+00> : vector<16x128xf32>
    %9 = tpu.matmul %7, %8, %cst_8 {dimension_numbers = #tpu.dot_dimension_numbers<[1], [0], [0], [1], [0, 0, 1, 1], [], []>} : vector<16x128xf32>, vector<128x128xf32>, vector<16x128xf32> -> vector<16x128xf32>
    %c0_9 = arith.constant 0 : index
    %c0_10 = arith.constant 0 : index
    %10 = vector.load %arg5[%c0_9, %c0_10] : memref<1x128xf32, #tpu.memory_space<vmem>>, vector<1x128xf32>
    %11 = vector.broadcast %10 : vector<1x128xf32> to vector<16x128xf32>
    %12 = arith.addf %9, %11 : vector<16x128xf32>
    %c0_11 = arith.constant 0 : index
    %c0_12 = arith.constant 0 : index
    %13 = vector.load %arg6[%c0_11, %c0_12] : memref<16x128xf32, #tpu.memory_space<vmem>>, vector<16x128xf32>
    tpu.vector_store %arg6[%c0_11, %c0_12], %7 {strides = array<i32>} : memref<16x128xf32, #tpu.memory_space<vmem>>, vector<16x128xf32>,
    %c0_13 = arith.constant 0 : index
    %c0_14 = arith.constant 0 : index
    %14 = vector.load %arg7[%c0_13, %c0_14] : memref<16x128xf32, #tpu.memory_space<vmem>>, vector<16x128xf32>
    tpu.vector_store %arg7[%c0_13, %c0_14], %12 {strides = array<i32>} : memref<16x128xf32, #tpu.memory_space<vmem>>, vector<16x128xf32>,
    %15 = arith.subf %12, %0 : vector<16x128xf32>
    %16 = arith.mulf %15, %15 : vector<16x128xf32>
    %cst_15 = arith.constant dense<0.000000e+00> : vector<16xf32>
    %17 = vector.multi_reduction <add>, %16, %cst_15 [1] : vector<16x128xf32> to vector<16xf32>
    %18 = vector.shape_cast %17 : vector<16xf32> to vector<16x1xf32>
    %19 = math.absf %7 : vector<16x128xf32>
    %cst_16 = arith.constant dense<0.000000e+00> : vector<16xf32>
    %20 = vector.multi_reduction <add>, %19, %cst_16 [1] : vector<16x128xf32> to vector<16xf32>
    %21 = vector.shape_cast %20 : vector<16xf32> to vector<16x1xf32>
    %c16_i32 = arith.constant 16 : i32
    %22 = arith.muli %arg0, %c16_i32 : i32
    %23 = tpu.iota {dimensions = array<i32: 0>} : vector<16x1xi32>
    %24 = vector.broadcast %22 : i32 to vector<16x1xi32>
    %25 = arith.addi %24, %23 : vector<16x1xi32>
    %c8_i32 = arith.constant 8 : i32
    %26 = vector.broadcast %c8_i32 : i32 to vector<16x1xi32>
    %27 = arith.cmpi slt, %25, %26 : vector<16x1xi32>
    %28 = arith.extui %27 : vector<16x1xi1> to vector<16x1xi32>
    %29 = arith.sitofp %28 : vector<16x1xi32> to vector<16x1xf32>
    %30 = arith.mulf %18, %29 : vector<16x1xf32>
    %31 = arith.mulf %21, %29 : vector<16x1xf32>
    %32 = vector.shape_cast %30 : vector<16x1xf32> to vector<1x16x1xf32>
    %cst_17 = arith.constant dense<0.000000e+00> : vector<1xf32>
    %33 = vector.multi_reduction <add>, %32, %cst_17 [1, 2] : vector<1x16x1xf32> to vector<1xf32>
    %34 = vector.shape_cast %33 : vector<1xf32> to vector<1x1x1xf32>
    %35 = vector.extract %34[0, 0, 0] : f32 from vector<1x1x1xf32>
    %36 = vector.broadcast %35 : f32 to vector<1x1x128xf32>
    %c0_18 = arith.constant 0 : index
    %c0_19 = arith.constant 0 : index
    %c0_20 = arith.constant 0 : index
    %37 = vector.load %arg8[%c0_18, %c0_19, %c0_20] : memref<1x1x128xf32, #tpu.memory_space<vmem>>, vector<1x1x128xf32>
    tpu.vector_store %arg8[%c0_18, %c0_19, %c0_20], %36 {strides = array<i32>} : memref<1x1x128xf32, #tpu.memory_space<vmem>>, vector<1x1x128xf32>,
    %38 = vector.shape_cast %31 : vector<16x1xf32> to vector<1x16x1xf32>
    %cst_21 = arith.constant dense<0.000000e+00> : vector<1xf32>
    %39 = vector.multi_reduction <add>, %38, %cst_21 [1, 2] : vector<1x16x1xf32> to vector<1xf32>
    %40 = vector.shape_cast %39 : vector<1xf32> to vector<1x1x1xf32>
    %41 = vector.extract %40[0, 0, 0] : f32 from vector<1x1x1xf32>
    %42 = vector.broadcast %41 : f32 to vector<1x1x128xf32>
    %c0_22 = arith.constant 0 : index
    %c0_23 = arith.constant 0 : index
    %c0_24 = arith.constant 0 : index
    %43 = vector.load %arg9[%c0_22, %c0_23, %c0_24] : memref<1x1x128xf32, #tpu.memory_space<vmem>>, vector<1x1x128xf32>
    tpu.vector_store %arg9[%c0_22, %c0_23, %c0_24], %42 {strides = array<i32>} : memref<1x1x128xf32, #tpu.memory_space<vmem>>, vector<1x1x128xf32>,
    return
  }
  func.func @transform_0(%arg0: i32) -> (i32, i32) {
    %c0_i32 = arith.constant 0 : i32
    %c0_i32_0 = arith.constant 0 : i32
    return %arg0, %c0_i32 : i32, i32
  }
  func.func @transform_1(%arg0: i32) -> (i32, i32) {
    %c0_i32 = arith.constant 0 : i32
    %c0_i32_0 = arith.constant 0 : i32
    %c0_i32_1 = arith.constant 0 : i32
    return %c0_i32, %c0_i32_0 : i32, i32
  }
  func.func @transform_2(%arg0: i32) -> (i32, i32) {
    %c0_i32 = arith.constant 0 : i32
    %c0_i32_0 = arith.constant 0 : i32
    %c0_i32_1 = arith.constant 0 : i32
    return %c0_i32, %c0_i32_0 : i32, i32
  }
  func.func @transform_3(%arg0: i32) -> (i32, i32) {
    %c0_i32 = arith.constant 0 : i32
    %c0_i32_0 = arith.constant 0 : i32
    %c0_i32_1 = arith.constant 0 : i32
    return %c0_i32, %c0_i32_0 : i32, i32
  }
  func.func @transform_4(%arg0: i32) -> (i32, i32) {
    %c0_i32 = arith.constant 0 : i32
    %c0_i32_0 = arith.constant 0 : i32
    %c0_i32_1 = arith.constant 0 : i32
    return %c0_i32, %c0_i32_0 : i32, i32
  }
  func.func @transform_5(%arg0: i32) -> (i32, i32) {
    %c0_i32 = arith.constant 0 : i32
    %c0_i32_0 = arith.constant 0 : i32
    return %arg0, %c0_i32 : i32, i32
  }
  func.func @transform_6(%arg0: i32) -> (i32, i32) {
    %c0_i32 = arith.constant 0 : i32
    %c0_i32_0 = arith.constant 0 : i32
    return %arg0, %c0_i32 : i32, i32
  }
  func.func @transform_7(%arg0: i32) -> (i32, i32, i32) {
    %c0_i32 = arith.constant 0 : i32
    %c0_i32_0 = arith.constant 0 : i32
    %c0_i32_1 = arith.constant 0 : i32
    return %arg0, %c0_i32, %c0_i32_0 : i32, i32, i32
  }
  func.func @transform_8(%arg0: i32) -> (i32, i32, i32) {
    %c0_i32 = arith.constant 0 : i32
    %c0_i32_0 = arith.constant 0 : i32
    %c0_i32_1 = arith.constant 0 : i32
    return %arg0, %c0_i32, %c0_i32_0 : i32, i32, i32
  }
}

</mosaic_0001>

<llo_original>
// kernel: tpu_custom_call.1
$region0: #{tpu_custom_call.1}
  #allocation0 [shape = 'u32[]', space=smem, size = 0x4, offset = 0x4, fixed_abs, tag = 'smem constant byte address 0x4 - core index']
  #allocation1 [shape = 'u32[144,128]{1,0:T(1,128)}', space=vmem, size = 0x12000, scoped, tag = 'internal scratch']
  %s0 = inlined_call_operand.hbm [shape: f32[16,128], index: 0, kind: input, shape index: {}]
  %s1 = inlined_call_operand.hbm [shape: f32[128,128], index: 1, kind: input, shape index: {}]
  %s2 = inlined_call_operand.vmem [shape: f32[1,128], index: 2, kind: input, shape index: {}]
  %s3 = inlined_call_operand.hbm [shape: f32[128,128], index: 3, kind: input, shape index: {}]
  %s4 = inlined_call_operand.vmem [shape: f32[1,128], index: 4, kind: input, shape index: {}]
  %s5 = inlined_call_operand.hbm [shape: f32[16,128], index: 5, kind: output, shape index: {0}]
  %s6 = inlined_call_operand.hbm [shape: f32[16,128], index: 6, kind: output, shape index: {1}]
  %s7 = inlined_call_operand.hbm [shape: f32[1,1,128], index: 7, kind: output, shape index: {2}]
  %s8 = inlined_call_operand.hbm [shape: f32[1,1,128], index: 8, kind: output, shape index: {3}]
  %9 = xla_tuple %s5, %s6, %s7, %s8
  %s10 = sld [smem:[#allocation0]]
  $region66: #{tpu_custom_call.1} parent=0
    _
  %s12 = ssub.s32 1, %s10
  %s13 = scalar_select 0, %s12, %s10
  $region1: #{tpu_custom_call.1} parent=0
    #allocation2 [shape = 'u8[8192]{0}', space=vmem, size = 0x2000, scoped, tag = 'input window, operand 0, single buffered']
    #allocation3 [shape = 's32[1]{0}', space=sflag, size = 0x4, scoped, tag = 'scoped memory for tpu_custom_call.1']
    #allocation4 [shape = 's32[1]{0}', space=sflag, size = 0x4, scoped, tag = 'scoped memory for tpu_custom_call.1']
    #allocation5 [shape = 'u8[65536]{0}', space=vmem, size = 0x10000, scoped, tag = 'input window, operand 1, single buffered']
    #allocation6 [shape = 's32[1]{0}', space=sflag, size = 0x4, scoped, tag = 'scoped memory for tpu_custom_call.1']
    #allocation7 [shape = 'u8[65536]{0}', space=vmem, size = 0x10000, scoped, tag = 'input window, operand 3, single buffered']
    #allocation8 [shape = 'u8[8192]{0}', space=vmem, size = 0x2000, scoped, tag = 'output window, operand 0, single buffered']
    #allocation9 [shape = 'u8[8192]{0}', space=vmem, size = 0x2000, scoped, tag = 'output window, operand 1, single buffered']
    #allocation10 [shape = 's32[1]{0}', space=sflag, size = 0x4, scoped, tag = 'scoped memory for tpu_custom_call.1']
    #allocation11 [shape = 'u8[512]{0}', space=vmem, size = 0x400, scoped, tag = 'output window, operand 2, single buffered']
    #allocation12 [shape = 'u8[512]{0}', space=vmem, size = 0x400, scoped, tag = 'output window, operand 3, single buffered']
    #allocation13 [shape = 's32[1]{0}', space=sflag, size = 0x4, scoped, tag = 'scoped memory for tpu_custom_call.1']
    %14 = vsyncpa [#allocation3], 0
    %15 = vsyncpa [#allocation6], 0
    %16 = vsyncpa [#allocation4], 0
    %17 = vsyncpa [#allocation10], 0
    %18 = vsyncpa [#allocation13], 0
    // Predicated region
    $region2: #{tpu_custom_call.1} parent=1 // pred_check
      _
    $region3: #{tpu_custom_call.1} parent=1 // pred_check_branch
      %20 = sbr.rel (0) target = $region5
    $region4: #{tpu_custom_call.1} parent=1 // pred_region
      %s22 = ssub.s32 256, 256
      %23 = vsyncadd [#allocation3], %s22
      %s24 = sshll.u32 [#allocation2], 4
      %s25 = int_to_ptr.vmem [resolvable:$true] %s24
      %30 = dma.hbm_to_vmem [thread:$0]  %s0, 256, %s25, [#allocation3], 128, 128, 8
    $region5: #{tpu_custom_call.1} parent=1 // pred_fallthru
      _
    // Predicated region
    $region6: #{tpu_custom_call.1} parent=1 // pred_check
      _
    $region7: #{tpu_custom_call.1} parent=1 // pred_check_branch
      %32 = sbr.rel (0) target = $region9
    $region8: #{tpu_custom_call.1} parent=1 // pred_region
      %s34 = ssub.s32 2048, 2048
      %35 = vsyncadd [#allocation6], %s34
      %s36 = sshll.u32 [#allocation5], 4
      %s37 = int_to_ptr.vmem [resolvable:$true] %s36
      %42 = dma.hbm_to_vmem [thread:$0]  %s1, 2048, %s37, [#allocation6], 128, 128, 8
    $region9: #{tpu_custom_call.1} parent=1 // pred_fallthru
      _
    // Predicated region
    $region10: #{tpu_custom_call.1} parent=1 // pred_check
      _
    $region11: #{tpu_custom_call.1} parent=1 // pred_check_branch
      %44 = sbr.rel (0) target = $region13
    $region12: #{tpu_custom_call.1} parent=1 // pred_region
      _
    $region13: #{tpu_custom_call.1} parent=1 // pred_fallthru
      _
    // Predicated region
    $region14: #{tpu_custom_call.1} parent=1 // pred_check
      _
    $region15: #{tpu_custom_call.1} parent=1 // pred_check_branch
      %46 = sbr.rel (0) target = $region17
    $region16: #{tpu_custom_call.1} parent=1 // pred_region
      %s48 = ssub.s32 2048, 2048
      %49 = vsyncadd [#allocation6], %s48
      %s50 = sshll.u32 [#allocation7], 4
      %s51 = int_to_ptr.vmem [resolvable:$true] %s50
      %56 = dma.hbm_to_vmem [thread:$0]  %s3, 2048, %s51, [#allocation6], 128, 128, 8
    $region17: #{tpu_custom_call.1} parent=1 // pred_fallthru
      _
    // Predicated region
    $region18: #{tpu_custom_call.1} parent=1 // pred_check
      _
    $region19: #{tpu_custom_call.1} parent=1 // pred_check_branch
      %58 = sbr.rel (0) target = $region21
    $region20: #{tpu_custom_call.1} parent=1 // pred_region
      _
    $region21: #{tpu_custom_call.1} parent=1 // pred_fallthru
      _
    // Predicated region
    $region22: #{tpu_custom_call.1} parent=1 // pred_check
      _
    $region23: #{tpu_custom_call.1} parent=1 // pred_check_branch
      %60 = sbr.rel (0) target = $region25
    $region24: #{tpu_custom_call.1} parent=1 // pred_region
      %61 = dma.done [#allocation3], 256
    $region25: #{tpu_custom_call.1} parent=1 // pred_fallthru
      _
    // Predicated region
    $region26: #{tpu_custom_call.1} parent=1 // pred_check
      _
    $region27: #{tpu_custom_call.1} parent=1 // pred_check_branch
      %63 = sbr.rel (0) target = $region29
    $region28: #{tpu_custom_call.1} parent=1 // pred_region
      %64 = dma.done [#allocation6], 2048
    $region29: #{tpu_custom_call.1} parent=1 // pred_fallthru
      _
    // Predicated region
    $region30: #{tpu_custom_call.1} parent=1 // pred_check
      _
    $region31: #{tpu_custom_call.1} parent=1 // pred_check_branch
      %66 = sbr.rel (0) target = $region33
    $region32: #{tpu_custom_call.1} parent=1 // pred_region
      %67 = dma.done [#allocation6], 2048
    $region33: #{tpu_custom_call.1} parent=1 // pred_fallthru
      _
    %v68 = vld [vmem:[#allocation2] sm:$0xff]
    %v69 = vld [vmem:[#allocation2 + $0x8] sm:$0xff]
    %v70 = vld [vmem:[#allocation5] sm:$0xff]
    %v71 = vld [vmem:[#allocation5 + $0x8] sm:$0xff]
    %v72 = vld [vmem:[#allocation5 + $0x10] sm:$0xff]
    %v73 = vld [vmem:[#allocation5 + $0x18] sm:$0xff]
    %v74 = vld [vmem:[#allocation5 + $0x20] sm:$0xff]
    %v75 = vld [vmem:[#allocation5 + $0x28] sm:$0xff]
    %v76 = vld [vmem:[#allocation5 + $0x30] sm:$0xff]
    %v77 = vld [vmem:[#allocation5 + $0x38] sm:$0xff]
    %v78 = vld [vmem:[#allocation5 + $0x40] sm:$0xff]
    %v79 = vld [vmem:[#allocation5 + $0x48] sm:$0xff]
    %v80 = vld [vmem:[#allocation5 + $0x50] sm:$0xff]
    %v81 = vld [vmem:[#allocation5 + $0x58] sm:$0xff]
    %v82 = vld [vmem:[#allocation5 + $0x60] sm:$0xff]
    %v83 = vld [vmem:[#allocation5 + $0x68] sm:$0xff]
    %v84 = vld [vmem:[#allocation5 + $0x70] sm:$0xff]
    %v85 = vld [vmem:[#allocation5 + $0x78] sm:$0xff]
    %v86 = vld [vmem:[%s2] sm:$0x1]
    %v88 = vlaneseq
    %v89 = vshrl.u32 %v88, 7
    %v90 = vsub.s32 0, %v89
    %v91 = vrot.slane %v86, %v90
    %93 = vmatprep.subr.mxu0 0.0
    %94 = vmatpush1.msra.mxu0 %v85
    %95 = vmatprep.subr.mxu0 0.0
    %96 = vmatpush1.msra.mxu0 %v84
    %97 = vmatprep.subr.mxu0 0.0
    %98 = vmatpush1.msra.mxu0 %v83
    %99 = vmatprep.subr.mxu0 0.0
    %100 = vmatpush1.msra.mxu0 %v82
    %101 = vmatprep.subr.mxu0 0.0
    %102 = vmatpush1.msra.mxu0 %v81
    %103 = vmatprep.subr.mxu0 0.0
    %104 = vmatpush1.msra.mxu0 %v80
    %105 = vmatprep.subr.mxu0 0.0
    %106 = vmatpush1.msra.mxu0 %v79
    %107 = vmatprep.subr.mxu0 0.0
    %108 = vmatpush1.msra.mxu0 %v78
    %109 = vmatprep.subr.mxu0 0.0
    %110 = vmatpush1.msra.mxu0 %v77
    %111 = vmatprep.subr.mxu0 0.0
    %112 = vmatpush1.msra.mxu0 %v76
    %113 = vmatprep.subr.mxu0 0.0
    %114 = vmatpush1.msra.mxu0 %v75
    %115 = vmatprep.subr.mxu0 0.0
    %116 = vmatpush1.msra.mxu0 %v74
    %117 = vmatprep.subr.mxu0 0.0
    %118 = vmatpush1.msra.mxu0 %v73
    %119 = vmatprep.subr.mxu0 0.0
    %120 = vmatpush1.msra.mxu0 %v72
    %121 = vmatprep.subr.mxu0 0.0
    %122 = vmatpush1.msra.mxu0 %v71
    %123 = vmatprep.subr.mxu0 0.0
    %124 = vmatpush1.msra.mxu0 %v70
    %125 = vmatprep.subr.mxu0 0.0
    %126 = vmatpush2.msra.mxu0 0.0
    %127 = vmatprep.subr.mxu0 0.0
    %128 = vmatpush2.msra.mxu0 0.0
    %129 = vmatprep.subr.mxu0 0.0
    %130 = vmatpush2.msra.mxu0 0.0
    %131 = vmatprep.subr.mxu0 0.0
    %132 = vmatpush2.msra.mxu0 0.0
    %133 = vmatprep.subr.mxu0 0.0
    %134 = vmatpush2.msra.mxu0 0.0
    %135 = vmatprep.subr.mxu0 0.0
    %136 = vmatpush2.msra.mxu0 0.0
    %137 = vmatprep.subr.mxu0 0.0
    %138 = vmatpush2.msra.mxu0 0.0
    %139 = vmatprep.subr.mxu0 0.0
    %140 = vmatpush2.msra.mxu0 0.0
    %141 = vmatprep.subr.mxu0 0.0
    %142 = vmatpush2.msra.mxu0 0.0
    %143 = vmatprep.subr.mxu0 0.0
    %144 = vmatpush2.msra.mxu0 0.0
    %145 = vmatprep.subr.mxu0 0.0
    %146 = vmatpush2.msra.mxu0 0.0
    %147 = vmatprep.subr.mxu0 0.0
    %148 = vmatpush2.msra.mxu0 0.0
    %149 = vmatprep.subr.mxu0 0.0
    %150 = vmatpush2.msra.mxu0 0.0
    %151 = vmatprep.subr.mxu0 0.0
    %152 = vmatpush2.msra.mxu0 0.0
    %153 = vmatprep.subr.mxu0 0.0
    %154 = vmatpush2.msra.mxu0 0.0
    %155 = vmatprep.subr.mxu0 0.0
    %156 = vmatpush2.msra.mxu0 0.0
    %157 = vmatprep.mubr.f32.mxu0 0.0
    %158 = vmatmul.mubr.f32.gmra.mxu0 %v68
    %v159 = vpop.f32.mrf.mxu0
    %v160 = vadd.f32 %v91, %v159
    %v161 = vpop.f32.mrf.mxu0
    %162 = vmatprep.mubr.f32.mxu0 0.0
    %163 = vmatmul.mubr.f32.gmra.mxu0 %v69
    %v164 = vpop.f32.mrf.mxu0
    %v165 = vadd.f32 %v91, %v164
    %v166 = vpop.f32.mrf.mxu0
    %167 = vdwg.mxu0
    %v168 = vmax.f32 %v160, 0.0
    %v169 = vmax.f32 %v165, 0.0
    %v170 = vld [vmem:[#allocation7] sm:$0xff]
    %v171 = vld [vmem:[#allocation7 + $0x8] sm:$0xff]
    %v172 = vld [vmem:[#allocation7 + $0x10] sm:$0xff]
    %v173 = vld [vmem:[#allocation7 + $0x18] sm:$0xff]
    %v174 = vld [vmem:[#allocation7 + $0x20] sm:$0xff]
    %v175 = vld [vmem:[#allocation7 + $0x28] sm:$0xff]
    %v176 = vld [vmem:[#allocation7 + $0x30] sm:$0xff]
    %v177 = vld [vmem:[#allocation7 + $0x38] sm:$0xff]
    %v178 = vld [vmem:[#allocation7 + $0x40] sm:$0xff]
    %v179 = vld [vmem:[#allocation7 + $0x48] sm:$0xff]
    %v180 = vld [vmem:[#allocation7 + $0x50] sm:$0xff]
    %v181 = vld [vmem:[#allocation7 + $0x58] sm:$0xff]
    %v182 = vld [vmem:[#allocation7 + $0x60] sm:$0xff]
    %v183 = vld [vmem:[#allocation7 + $0x68] sm:$0xff]
    %v184 = vld [vmem:[#allocation7 + $0x70] sm:$0xff]
    %v185 = vld [vmem:[#allocation7 + $0x78] sm:$0xff]
    %v186 = vld [vmem:[%s4] sm:$0x1]
    %v188 = vlaneseq
    %v189 = vshrl.u32 %v188, 7
    %v190 = vsub.s32 0, %v189
    %v191 = vrot.slane %v186, %v190
    %193 = vmatprep.subr.mxu0 0.0
    %194 = vmatpush1.msra.mxu0 %v185
    %195 = vmatprep.subr.mxu0 0.0
    %196 = vmatpush1.msra.mxu0 %v184
    %197 = vmatprep.subr.mxu0 0.0
    %198 = vmatpush1.msra.mxu0 %v183
    %199 = vmatprep.subr.mxu0 0.0
    %200 = vmatpush1.msra.mxu0 %v182
    %201 = vmatprep.subr.mxu0 0.0
    %202 = vmatpush1.msra.mxu0 %v181
    %203 = vmatprep.subr.mxu0 0.0
    %204 = vmatpush1.msra.mxu0 %v180
    %205 = vmatprep.subr.mxu0 0.0
    %206 = vmatpush1.msra.mxu0 %v179
    %207 = vmatprep.subr.mxu0 0.0
    %208 = vmatpush1.msra.mxu0 %v178
    %209 = vmatprep.subr.mxu0 0.0
    %210 = vmatpush1.msra.mxu0 %v177
    %211 = vmatprep.subr.mxu0 0.0
    %212 = vmatpush1.msra.mxu0 %v176
    %213 = vmatprep.subr.mxu0 0.0
    %214 = vmatpush1.msra.mxu0 %v175
    %215 = vmatprep.subr.mxu0 0.0
    %216 = vmatpush1.msra.mxu0 %v174
    %217 = vmatprep.subr.mxu0 0.0
    %218 = vmatpush1.msra.mxu0 %v173
    %219 = vmatprep.subr.mxu0 0.0
    %220 = vmatpush1.msra.mxu0 %v172
    %221 = vmatprep.subr.mxu0 0.0
    %222 = vmatpush1.msra.mxu0 %v171
    %223 = vmatprep.subr.mxu0 0.0
    %224 = vmatpush1.msra.mxu0 %v170
    %225 = vmatprep.subr.mxu0 0.0
    %226 = vmatpush2.msra.mxu0 0.0
    %227 = vmatprep.subr.mxu0 0.0
    %228 = vmatpush2.msra.mxu0 0.0
    %229 = vmatprep.subr.mxu0 0.0
    %230 = vmatpush2.msra.mxu0 0.0
    %231 = vmatprep.subr.mxu0 0.0
    %232 = vmatpush2.msra.mxu0 0.0
    %233 = vmatprep.subr.mxu0 0.0
    %234 = vmatpush2.msra.mxu0 0.0
    %235 = vmatprep.subr.mxu0 0.0
    %236 = vmatpush2.msra.mxu0 0.0
    %237 = vmatprep.subr.mxu0 0.0
    %238 = vmatpush2.msra.mxu0 0.0
    %239 = vmatprep.subr.mxu0 0.0
    %240 = vmatpush2.msra.mxu0 0.0
    %241 = vmatprep.subr.mxu0 0.0
    %242 = vmatpush2.msra.mxu0 0.0
    %243 = vmatprep.subr.mxu0 0.0
    %244 = vmatpush2.msra.mxu0 0.0
    %245 = vmatprep.subr.mxu0 0.0
    %246 = vmatpush2.msra.mxu0 0.0
    %247 = vmatprep.subr.mxu0 0.0
    %248 = vmatpush2.msra.mxu0 0.0
    %249 = vmatprep.subr.mxu0 0.0
    %250 = vmatpush2.msra.mxu0 0.0
    %251 = vmatprep.subr.mxu0 0.0
    %252 = vmatpush2.msra.mxu0 0.0
    %253 = vmatprep.subr.mxu0 0.0
    %254 = vmatpush2.msra.mxu0 0.0
    %255 = vmatprep.subr.mxu0 0.0
    %256 = vmatpush2.msra.mxu0 0.0
    %257 = vmatprep.mubr.f32.mxu0 0.0
    %258 = vmatmul.mubr.f32.gmra.mxu0 %v168
    %v259 = vpop.f32.mrf.mxu0
    %v260 = vadd.f32 %v191, %v259
    %v261 = vpop.f32.mrf.mxu0
    %262 = vmatprep.mubr.f32.mxu0 0.0
    %263 = vmatmul.mubr.f32.gmra.mxu0 %v169
    %v264 = vpop.f32.mrf.mxu0
    %v265 = vadd.f32 %v191, %v264
    %v266 = vpop.f32.mrf.mxu0
    %267 = vdwg.mxu0
    %268 = vst [vmem:[#allocation8] sm:$0xff] %v168
    %269 = vst [vmem:[#allocation8 + $0x8] sm:$0xff] %v169
    %270 = vst [vmem:[#allocation9] sm:$0xff] %v260
    %271 = vst [vmem:[#allocation9 + $0x8] sm:$0xff] %v265
    %v272 = vsub.f32 %v260, %v68
    %v273 = vsub.f32 %v265, %v69
    %v274 = vmul.f32 %v272, %v272
    %v275 = vmul.f32 %v273, %v273
    %276 = vadd.xlane.f32.xlu0 %v274
    %v277 = vpop.xlane.xlu0 %276
    %278 = vadd.xlane.f32.xlu0 %v275
    %v279 = vpop.xlane.xlu0 %278
    %v280 = vand.u32 2147483647, %v168
    %v281 = vand.u32 2147483647, %v169
    %282 = vadd.xlane.f32.xlu0 %v280
    %v283 = vpop.xlane.xlu0 %282
    %284 = vadd.xlane.f32.xlu0 %v281
    %v285 = vpop.xlane.xlu0 %284
    %s286 = smul.u32 0, 16
    %v287 = vlaneseq
    %v288 = vshrl.u32 %v287, 7
    %v289 = vadd.s32 %v288, 8
    %v290 = vstv %s286
    %v291 = vadd.s32 %v290, %v288
    %v292 = vadd.s32 %v290, %v289
    %vm293 = vcmp.lt.s32.totalorder %v291, 8
    %vm294 = vcmp.lt.s32.totalorder %v292, 8
    %v295 = vsel %vm293, 1, 0
    %v296 = vsel %vm294, 1, 0
    %v297 = vcvt.s32.f32 %v295
    %v298 = vcvt.s32.f32 %v296
    %v299 = vmul.f32 %v277, %v297
    %v300 = vmul.f32 %v279, %v298
    %v301 = vmul.f32 %v283, %v297
    %v302 = vmul.f32 %v285, %v298
    %vm303 = vcmask 7168
    %v304 = vsel %vm303, %v299, 0.0
    %v305 = vsel %vm303, %v300, 0.0
    %v306 = vadd.f32 %v304, %v305
    %307 = vadd.xlane.f32.xlu0 %v306
    %v308 = vpop.xlane.xlu0 %307
    %v309 = vrot.slane %v308, 4
    %v310 = vadd.f32 %v308, %v309
    %v311 = vrot.slane %v310, 2
    %v312 = vadd.f32 %v310, %v311
    %v313 = vrot.slane %v312, 1
    %v314 = vadd.f32 %v312, %v313
    %s315 = vtos %v314
    %v316 = vstv %s315
    %317 = vst [vmem:[#allocation11] sm:$0x1] %v316
    %v318 = vsel %vm303, %v301, 0.0
    %v319 = vsel %vm303, %v302, 0.0
    %v320 = vadd.f32 %v318, %v319
    %321 = vadd.xlane.f32.xlu0 %v320
    %v322 = vpop.xlane.xlu0 %321
    %v323 = vrot.slane %v322, 4
    %v324 = vadd.f32 %v322, %v323
    %v325 = vrot.slane %v324, 2
    %v326 = vadd.f32 %v324, %v325
    %v327 = vrot.slane %v326, 1
    %v328 = vadd.f32 %v326, %v327
    %s329 = vtos %v328
    %v330 = vstv %s329
    %331 = vst [vmem:[#allocation12] sm:$0x1] %v330
    // Predicated region
    $region34: #{tpu_custom_call.1} parent=1 // pred_check
      _
    $region35: #{tpu_custom_call.1} parent=1 // pred_check_branch
      %333 = sbr.rel (0) target = $region37
    $region36: #{tpu_custom_call.1} parent=1 // pred_region
      %s335 = ssub.s32 256, 256
      %336 = vsyncadd [#allocation4], %s335
      %s337 = sshll.u32 [#allocation8], 4
      %s338 = int_to_ptr.vmem [resolvable:$true] %s337
      %343 = dma.vmem_to_hbm [thread:$0]  %s338, 256, %s5, [#allocation4], 128, 128, 8
    $region37: #{tpu_custom_call.1} parent=1 // pred_fallthru
      _
    // Predicated region
    $region38: #{tpu_custom_call.1} parent=1 // pred_check
      _
    $region39: #{tpu_custom_call.1} parent=1 // pred_check_branch
      %345 = sbr.rel (0) target = $region41
    $region40: #{tpu_custom_call.1} parent=1 // pred_region
      %s347 = ssub.s32 256, 256
      %348 = vsyncadd [#allocation10], %s347
      %s349 = sshll.u32 [#allocation9], 4
      %s350 = int_to_ptr.vmem [resolvable:$true] %s349
      %355 = dma.vmem_to_hbm [thread:$0]  %s350, 256, %s6, [#allocation10], 128, 128, 8
    $region41: #{tpu_custom_call.1} parent=1 // pred_fallthru
      _
    // Predicated region
    $region42: #{tpu_custom_call.1} parent=1 // pred_check
      _
    $region43: #{tpu_custom_call.1} parent=1 // pred_check_branch
      %357 = sbr.rel (0) target = $region45
    $region44: #{tpu_custom_call.1} parent=1 // pred_region
      %s359 = ssub.s32 16, 16
      %360 = vsyncadd [#allocation10], %s359
      %s362 = sshll.u32 [#allocation11], 4
      %s363 = int_to_ptr.vmem [resolvable:$true] %s362
      %365 = dma.vmem_to_hbm [thread:$0]  %s363, 16, %s7, [#allocation10]
    $region45: #{tpu_custom_call.1} parent=1 // pred_fallthru
      _
    // Predicated region
    $region46: #{tpu_custom_call.1} parent=1 // pred_check
      _
    $region47: #{tpu_custom_call.1} parent=1 // pred_check_branch
      %367 = sbr.rel (0) target = $region49
    $region48: #{tpu_custom_call.1} parent=1 // pred_region
      %s369 = ssub.s32 16, 16
      %370 = vsyncadd [#allocation13], %s369
      %s372 = sshll.u32 [#allocation12], 4
      %s373 = int_to_ptr.vmem [resolvable:$true] %s372
      %375 = dma.vmem_to_hbm [thread:$0]  %s373, 16, %s8, [#allocation13]
    $region49: #{tpu_custom_call.1} parent=1 // pred_fallthru
      _
    // Predicated region
    $region50: #{tpu_custom_call.1} parent=1 // pred_check
      _
    $region51: #{tpu_custom_call.1} parent=1 // pred_check_branch
      %377 = sbr.rel (0) target = $region53
    $region52: #{tpu_custom_call.1} parent=1 // pred_region
      %378 = dma.done [#allocation4], 256
    $region53: #{tpu_custom_call.1} parent=1 // pred_fallthru
      _
    // Predicated region
    $region54: #{tpu_custom_call.1} parent=1 // pred_check
      _
    $region55: #{tpu_custom_call.1} parent=1 // pred_check_branch
      %380 = sbr.rel (0) target = $region57
    $region56: #{tpu_custom_call.1} parent=1 // pred_region
      %381 = dma.done [#allocation10], 256
    $region57: #{tpu_custom_call.1} parent=1 // pred_fallthru
      _
    // Predicated region
    $region58: #{tpu_custom_call.1} parent=1 // pred_check
      _
    $region59: #{tpu_custom_call.1} parent=1 // pred_check_branch
      %383 = sbr.rel (0) target = $region61
    $region60: #{tpu_custom_call.1} parent=1 // pred_region
      %384 = dma.done [#allocation10], 16
    $region61: #{tpu_custom_call.1} parent=1 // pred_fallthru
      _
    // Predicated region
    $region62: #{tpu_custom_call.1} parent=1 // pred_check
      _
    $region63: #{tpu_custom_call.1} parent=1 // pred_check_branch
      %386 = sbr.rel (0) target = $region65
    $region64: #{tpu_custom_call.1} parent=1 // pred_region
      %387 = dma.done [#allocation13], 16
    $region65: #{tpu_custom_call.1} parent=1 // pred_fallthru
      _
    %388 = vsyncpa [#allocation3], 1
    %389 = vsyncpa [#allocation6], 1
    %390 = vsyncpa [#allocation4], 1
    %391 = vsyncpa [#allocation10], 1
    %392 = vsyncpa [#allocation13], 1

</llo_original>
